<compile_context>
chip_gen: v5e
topology: v5e:2x2
jax: 0.10.0
libtpu: 0.0.40
codegen_flags: <defaults>
</compile_context>

<pallas_src>
import math
import functools

import jax
import jax.numpy as jnp
import numpy as np
from jax.experimental import pallas as pl
from jax.experimental.pallas import tpu as pltpu


# ------------------------- in-kernel helpers -------------------------

def _layernorm(x, w, b, eps=1e-5):
    mu = jnp.mean(x, axis=-1, keepdims=True)
    var = jnp.mean(jnp.square(x - mu), axis=-1, keepdims=True)
    return (x - mu) * jax.lax.rsqrt(var + eps) * w + b


def _gelu_tanh(x):
    # GELU(approximate='tanh'), computed in f32 (tanh -> EUP slot)
    c = math.sqrt(2.0 / math.pi)
    return 0.5 * x * (1.0 + jnp.tanh(c * (x + 0.044715 * x * x * x)))


# ------------------------- Pallas kernel -------------------------

def block_kernel(x_ref,
                 ln1_w_ref, ln1_b_ref,
                 wqkv_ref, bqkv_ref,
                 wo_ref, proj_b_ref,
                 ln2_w_ref, ln2_b_ref,
                 fc_w_ref, fc_b_ref,
                 cproj_w_ref, cproj_b_ref,
                 out_ref,
                 *, n_head, compute_dtype):
    f32 = jnp.float32
    Bblk, T, C = x_ref.shape
    hd = C // n_head
    M = Bblk * T

    # (Bblk, T, C) -> (M, C): leading-dim merge, no relayout.
    x = x_ref[...].reshape(M, C)

    # ---- ln_1 + multi-head self-attention ----
    h = _layernorm(x, ln1_w_ref[...], ln1_b_ref[...])            # f32 (M, C)

    # Single fat QKV matmul: (M, C) @ (C, 3C) -> (M, 3C).
    # The 1/sqrt(hd) softmax scale is pre-folded into the q columns (wrapper).
    qkv = jnp.dot(h.astype(compute_dtype), wqkv_ref[...],
                  preferred_element_type=f32) + bqkv_ref[...]

    # Head-batched (n_head*Bblk, T, hd) operands via static slices + stack
    # (no 4-D transpose; for n_head == 1 this is a pure leading-dim reshape).
    def split_heads(a2d):
        if n_head == 1:
            parts = [a2d]
        else:
            parts = [a2d[:, h0 * hd:(h0 + 1) * hd] for h0 in range(n_head)]
        stacked = jnp.stack(parts, axis=0)                 # (H, M, hd)
        return stacked.reshape(n_head * Bblk, T, hd).astype(compute_dtype)

    qh = split_heads(qkv[:, 0:C])
    kh = split_heads(qkv[:, C:2 * C])
    vh = split_heads(qkv[:, 2 * C:3 * C])

    # scores: contract last dims (no explicit transpose) -> (H*Bblk, T, T)
    s = jax.lax.dot_general(
        qh, kh,
        dimension_numbers=(((2,), (2,)), ((0,), (0,))),
        preferred_element_type=f32)
    s = s - jnp.max(s, axis=-1, keepdims=True)
    p = jnp.exp(s)
    p = p * pl.reciprocal(jnp.sum(p, axis=-1, keepdims=True), approx=True)

    # (H*Bblk, T, T) @ (H*Bblk, T, hd) -> (H*Bblk, T, hd)
    o = jax.lax.dot_general(
        p.astype(compute_dtype), vh,
        dimension_numbers=(((2,), (1,)), ((0,), (0,))),
        preferred_element_type=f32)

    # Merge heads back to (M, C): head h occupies columns [h*hd, (h+1)*hd),
    # matching PyTorch's transpose(1,2).view(B,T,C).
    o = o.reshape(n_head, M, hd)
    if n_head == 1:
        o_merged = o.reshape(M, C)
    else:
        o_merged = jnp.concatenate([o[h0] for h0 in range(n_head)], axis=-1)

    # Single output projection: (M, C) @ (C, C).
    attn_out = jnp.dot(o_merged.astype(compute_dtype), wo_ref[...],
                       preferred_element_type=f32) + proj_b_ref[...]
    x1 = x + attn_out

    # ---- ln_2 + MLP (GELU tanh) ----
    h2 = _layernorm(x1, ln2_w_ref[...], ln2_b_ref[...])
    fc = jnp.dot(h2.astype(compute_dtype), fc_w_ref[...],
                 preferred_element_type=f32) + fc_b_ref[...]
    fc = _gelu_tanh(fc)
    mlp_out = jnp.dot(fc.astype(compute_dtype), cproj_w_ref[...],
                      preferred_element_type=f32) + cproj_b_ref[...]

    y = (x1 + mlp_out).astype(out_ref.dtype)
    out_ref[...] = y.reshape(out_ref.shape)    # leading-dim split, free


# ------------------------- weight preparation -------------------------

def prepare_block_params(raw, n_head, compute_dtype=jnp.bfloat16):
    """Cast matmul weights to `compute_dtype` (bf16) and fold the softmax
    scale into the q columns of c_attn; LN params / biases stay f32 and are
    passed lane-major as (1, N)."""
    C = raw["attn_w"].shape[0]
    assert C % n_head == 0, "n_embd must be divisible by n_head"
    hd = C // n_head
    scale = 1.0 / math.sqrt(hd)

    wqkv = raw["attn_w"].astype(jnp.float32).at[:, 0:C].multiply(scale)
    bqkv = raw["attn_b"].astype(jnp.float32).at[0:C].multiply(scale)

    return dict(
        ln1_w=raw["ln1_w"].reshape(1, C).astype(jnp.float32),
        ln1_b=raw["ln1_b"].reshape(1, C).astype(jnp.float32),
        wqkv=wqkv.astype(compute_dtype),                      # (C, 3C)
        bqkv=bqkv.reshape(1, 3 * C).astype(jnp.float32),
        wo=raw["proj_w"].astype(compute_dtype),               # (C, C)
        proj_b=raw["proj_b"].reshape(1, C).astype(jnp.float32),
        ln2_w=raw["ln2_w"].reshape(1, C).astype(jnp.float32),
        ln2_b=raw["ln2_b"].reshape(1, C).astype(jnp.float32),
        fc_w=raw["fc_w"].astype(compute_dtype),               # (C, 4C)
        fc_b=raw["fc_b"].reshape(1, 4 * C).astype(jnp.float32),
        cproj_w=raw["cproj_w"].astype(compute_dtype),         # (4C, C)
        cproj_b=raw["cproj_b"].reshape(1, C).astype(jnp.float32),
    )


# ------------------------- wrapper -------------------------

def block_forward(x, prepared, n_head, *, compute_dtype=jnp.bfloat16,
                  batch_block=None):
    B, T, C = x.shape
    assert C % n_head == 0

    # Batch blocking: fold batch_block*T rows into the matmul M dimension per
    # grid step.  Keep 2 grid steps when B is even so ("parallel",) semantics
    # can shard steps across v7x's two TensorCores; odd B falls back to a
    # single step (minimum per-step pipeline overhead on v5e/v6e).
    if batch_block is None:
        batch_block = B // 2 if (B % 2 == 0 and B >= 2) else B
    assert B % batch_block == 0
    steps = B // batch_block

    ordered = [
        prepared["ln1_w"], prepared["ln1_b"],
        prepared["wqkv"], prepared["bqkv"],
        prepared["wo"], prepared["proj_b"],
        prepared["ln2_w"], prepared["ln2_b"],
        prepared["fc_w"], prepared["fc_b"],
        prepared["cproj_w"], prepared["cproj_b"],
    ]

    def whole(arr):
        nd = arr.ndim
        # Whole-array block with a constant index_map: the weight stays
        # resident in VMEM across the grid (no re-DMA per step).
        return pl.BlockSpec(arr.shape, lambda b, _nd=nd: (0,) * _nd)

    in_specs = [pl.BlockSpec((batch_block, T, C), lambda b: (b, 0, 0))] + \
               [whole(a) for a in ordered]
    out_specs = pl.BlockSpec((batch_block, T, C), lambda b: (b, 0, 0))

    # ---- advisory cost estimate ----
    hd = C // n_head
    flops = int(2 * B * T * 12 * C * C + 4 * B * n_head * T * T * hd)
    transcendentals = int(B * (n_head * T * T + 4 * T * C))
    param_bytes = sum(int(np.prod(a.shape)) * a.dtype.itemsize for a in ordered)
    bytes_accessed = int(2 * B * T * C * 4 + param_bytes)

    # ---- explicit VMEM budget (cap at 40 MiB: v7x has 64 MiB physical) ----
    M = batch_block * T
    act_bytes = 4 * M * (14 * C + 8 * C) \
        + 2 * M * (9 * C) \
        + 6 * batch_block * n_head * T * T
    io_bytes = 2 * 2 * batch_block * T * C * 4   # double-buffered x / out
    vmem_limit = int(min(max(4 * (param_bytes + act_bytes + io_bytes),
                             16 * 2 ** 20),
                         40 * 2 ** 20))

    kernel = functools.partial(block_kernel, n_head=n_head,
                               compute_dtype=compute_dtype)
    return pl.pallas_call(
        kernel,
        out_shape=jax.ShapeDtypeStruct((B, T, C), x.dtype),
        grid=(steps,),
        in_specs=in_specs,
        out_specs=out_specs,
        compiler_params=pltpu.CompilerParams(
            dimension_semantics=("parallel",),
            vmem_limit_bytes=vmem_limit),
        cost_estimate=pl.CostEstimate(
            flops=flops,
            transcendentals=transcendentals,
            bytes_accessed=bytes_accessed),
    )(x, *ordered)


# ------------------------- pure-JAX reference -------------------------

def block_reference(x, params, n_head):
    B, T, C = x.shape
    hd = C // n_head

    def ln(v, w, b):
        mu = jnp.mean(v, axis=-1, keepdims=True)
        var = jnp.mean((v - mu) ** 2, axis=-1, keepdims=True)
        return (v - mu) / jnp.sqrt(var + 1e-5) * w + b

    h = ln(x, params["ln1_w"], params["ln1_b"])
    qkv = h @ params["attn_w"] + params["attn_b"]
    q, k, v = jnp.split(qkv, 3, axis=-1)
    q = q.reshape(B, T, n_head, hd).transpose(0, 2, 1, 3)
    k = k.reshape(B, T, n_head, hd).transpose(0, 2, 1, 3)
    v = v.reshape(B, T, n_head, hd).transpose(0, 2, 1, 3)
    attn = (q @ k.transpose(0, 1, 3, 2)) / math.sqrt(hd)
    attn = jax.nn.softmax(attn, axis=-1)
    o = (attn @ v).transpose(0, 2, 1, 3).reshape(B, T, C)
    o = o @ params["proj_w"] + params["proj_b"]
    x1 = x + o

    h2 = ln(x1, params["ln2_w"], params["ln2_b"])
    fc = h2 @ params["fc_w"] + params["fc_b"]
    c = math.sqrt(2.0 / math.pi)
    fc = 0.5 * fc * (1.0 + jnp.tanh(c * (fc + 0.044715 * fc ** 3)))
    mlp_out = fc @ params["cproj_w"] + params["cproj_b"]
    return x1 + mlp_out


# ------------------------- main -------------------------

def _make_raw_params(key, C):
    ks = jax.random.split(key, 12)

    def g(k, shape, s=0.02):
        return (s * jax.random.normal(k, shape)).astype(jnp.float32)

    return {
        "ln1_w": 1.0 + g(ks[0], (C,), 0.1),
        "ln1_b": g(ks[1], (C,), 0.1),
        "attn_w": g(ks[2], (C, 3 * C)),
        "attn_b": g(ks[3], (3 * C,)),
        "proj_w": g(ks[4], (C, C)),
        "proj_b": g(ks[5], (C,)),
        "ln2_w": 1.0 + g(ks[6], (C,), 0.1),
        "ln2_b": g(ks[7], (C,), 0.1),
        "fc_w": g(ks[8], (C, 4 * C)),
        "fc_b": g(ks[9], (4 * C,)),
        "cproj_w": g(ks[10], (4 * C, C)),
        "cproj_b": g(ks[11], (C,)),
    }


if __name__ == "__main__":
    # Ennet-like small shapes: hidden = N * emb_dim = 4 * 8 = 32, seq = hp*wp = 8.
    B, T, C = 2, 8, 32
    # n_head=1 matches Ennet's AttentionConfig default; n_head=4 exercises the
    # multi-head (stack/concat head split-merge) path.
    configs = [("ennet_default", 1), ("multi_head", 4)]

    key = jax.random.PRNGKey(0)
    for name, n_head in configs:
        key, pkey, xkey = jax.random.split(key, 3)
        raw = _make_raw_params(pkey, C)
        x = jax.random.normal(xkey, (B, T, C), dtype=jnp.float32)

        prepared = prepare_block_params(raw, n_head, compute_dtype=jnp.bfloat16)
        out = jax.block_until_ready(
            block_forward(x, prepared, n_head, compute_dtype=jnp.bfloat16))

        ref = block_reference(x, raw, n_head)
        # bf16 matmul operands + approx reciprocal -> slightly looser tolerance
        np.testing.assert_allclose(np.asarray(out), np.asarray(ref),
                                   atol=2e-2, rtol=2e-2)

    print("KERNEL_OK")
</pallas_src>

<mosaic_0001>
module attributes {stable_mosaic.version = 11 : i64} {
  func.func @block_kernel(%arg0: i32, %arg1: memref<1x8x32xf32, #tpu.memory_space<vmem>>, %arg2: memref<1x32xf32, #tpu.memory_space<vmem>>, %arg3: memref<1x32xf32, #tpu.memory_space<vmem>>, %arg4: memref<32x96xbf16, #tpu.memory_space<vmem>>, %arg5: memref<1x96xf32, #tpu.memory_space<vmem>>, %arg6: memref<32x32xbf16, #tpu.memory_space<vmem>>, %arg7: memref<1x32xf32, #tpu.memory_space<vmem>>, %arg8: memref<1x32xf32, #tpu.memory_space<vmem>>, %arg9: memref<1x32xf32, #tpu.memory_space<vmem>>, %arg10: memref<32x128xbf16, #tpu.memory_space<vmem>>, %arg11: memref<1x128xf32, #tpu.memory_space<vmem>>, %arg12: memref<128x32xbf16, #tpu.memory_space<vmem>>, %arg13: memref<1x32xf32, #tpu.memory_space<vmem>>, %arg14: memref<1x8x32xf32, #tpu.memory_space<vmem>>) attributes {dimension_semantics = [#tpu.dimension_semantics<parallel>], iteration_bounds = array<i64: 2>, scalar_prefetch = 0 : i64, scratch_operands = 0 : i64, tpu.core_type = #tpu.core_type<tc>, window_params = [{transform_indices = @transform_0, window_bounds = array<i64: 1, 8, 32>}, {pipeline_mode = #tpu.pipeline_mode<synchronous>, transform_indices = @transform_1, window_bounds = array<i64: 1, 32>}, {pipeline_mode = #tpu.pipeline_mode<synchronous>, transform_indices = @transform_2, window_bounds = array<i64: 1, 32>}, {pipeline_mode = #tpu.pipeline_mode<synchronous>, transform_indices = @transform_3, window_bounds = array<i64: 32, 96>}, {pipeline_mode = #tpu.pipeline_mode<synchronous>, transform_indices = @transform_4, window_bounds = array<i64: 1, 96>}, {pipeline_mode = #tpu.pipeline_mode<synchronous>, transform_indices = @transform_5, window_bounds = array<i64: 32, 32>}, {pipeline_mode = #tpu.pipeline_mode<synchronous>, transform_indices = @transform_6, window_bounds = array<i64: 1, 32>}, {pipeline_mode = #tpu.pipeline_mode<synchronous>, transform_indices = @transform_7, window_bounds = array<i64: 1, 32>}, {pipeline_mode = #tpu.pipeline_mode<synchronous>, transform_indices = @transform_8, window_bounds = array<i64: 1, 32>}, {pipeline_mode = #tpu.pipeline_mode<synchronous>, transform_indices = @transform_9, window_bounds = array<i64: 32, 128>}, {pipeline_mode = #tpu.pipeline_mode<synchronous>, transform_indices = @transform_10, window_bounds = array<i64: 1, 128>}, {pipeline_mode = #tpu.pipeline_mode<synchronous>, transform_indices = @transform_11, window_bounds = array<i64: 128, 32>}, {pipeline_mode = #tpu.pipeline_mode<synchronous>, transform_indices = @transform_12, window_bounds = array<i64: 1, 32>}, {transform_indices = @transform_13, window_bounds = array<i64: 1, 8, 32>}]} {
    %c0 = arith.constant 0 : index
    %c0_0 = arith.constant 0 : index
    %c0_1 = arith.constant 0 : index
    %0 = vector.load %arg1[%c0, %c0_0, %c0_1] : memref<1x8x32xf32, #tpu.memory_space<vmem>>, vector<1x8x32xf32>
    %1 = vector.shape_cast %0 : vector<1x8x32xf32> to vector<8x32xf32>
    %c0_2 = arith.constant 0 : index
    %c0_3 = arith.constant 0 : index
    %2 = vector.load %arg2[%c0_2, %c0_3] : memref<1x32xf32, #tpu.memory_space<vmem>>, vector<1x32xf32>
    %c0_4 = arith.constant 0 : index
    %c0_5 = arith.constant 0 : index
    %3 = vector.load %arg3[%c0_4, %c0_5] : memref<1x32xf32, #tpu.memory_space<vmem>>, vector<1x32xf32>
    %cst = arith.constant dense<0.000000e+00> : vector<8xf32>
    %4 = vector.multi_reduction <add>, %1, %cst [1] : vector<8x32xf32> to vector<8xf32>
    %5 = vector.shape_cast %4 : vector<8xf32> to vector<8x1xf32>
    %cst_6 = arith.constant 3.200000e+01 : f32
    %6 = vector.broadcast %cst_6 : f32 to vector<8x1xf32>
    %7 = arith.divf %5, %6 : vector<8x1xf32>
    %8 = vector.broadcast %7 : vector<8x1xf32> to vector<8x32xf32>
    %9 = arith.subf %1, %8 : vector<8x32xf32>
    %10 = arith.mulf %9, %9 : vector<8x32xf32>
    %cst_7 = arith.constant dense<0.000000e+00> : vector<8xf32>
    %11 = vector.multi_reduction <add>, %10, %cst_7 [1] : vector<8x32xf32> to vector<8xf32>
    %12 = vector.shape_cast %11 : vector<8xf32> to vector<8x1xf32>
    %cst_8 = arith.constant 3.200000e+01 : f32
    %13 = vector.broadcast %cst_8 : f32 to vector<8x1xf32>
    %14 = arith.divf %12, %13 : vector<8x1xf32>
    %15 = vector.broadcast %7 : vector<8x1xf32> to vector<8x32xf32>
    %16 = arith.subf %1, %15 : vector<8x32xf32>
    %cst_9 = arith.constant 9.99999974E-6 : f32
    %17 = vector.broadcast %cst_9 : f32 to vector<8x1xf32>
    %18 = arith.addf %14, %17 : vector<8x1xf32>
    %19 = math.rsqrt %18 : vector<8x1xf32>
    %20 = vector.broadcast %19 : vector<8x1xf32> to vector<8x32xf32>
    %21 = arith.mulf %16, %20 : vector<8x32xf32>
    %22 = vector.broadcast %2 : vector<1x32xf32> to vector<8x32xf32>
    %23 = arith.mulf %21, %22 : vector<8x32xf32>
    %24 = vector.broadcast %3 : vector<1x32xf32> to vector<8x32xf32>
    %25 = arith.addf %23, %24 : vector<8x32xf32>
    %26 = arith.truncf %25 : vector<8x32xf32> to vector<8x32xbf16>
    %c0_10 = arith.constant 0 : index
    %c0_11 = arith.constant 0 : index
    %27 = vector.load %arg4[%c0_10, %c0_11] : memref<32x96xbf16, #tpu.memory_space<vmem>>, vector<32x96xbf16>
    %cst_12 = arith.constant dense<0.000000e+00> : vector<8x96xf32>
    %28 = tpu.matmul %26, %27, %cst_12 {dimension_numbers = #tpu.dot_dimension_numbers<[1], [0], [0], [1], [0, 0, 1, 1], [], []>} : vector<8x32xbf16>, vector<32x96xbf16>, vector<8x96xf32> -> vector<8x96xf32>
    %c0_13 = arith.constant 0 : index
    %c0_14 = arith.constant 0 : index
    %29 = vector.load %arg5[%c0_13, %c0_14] : memref<1x96xf32, #tpu.memory_space<vmem>>, vector<1x96xf32>
    %30 = vector.broadcast %29 : vector<1x96xf32> to vector<8x96xf32>
    %31 = arith.addf %28, %30 : vector<8x96xf32>
    %32 = vector.extract_strided_slice %31 {offsets = [0, 0], sizes = [8, 32], strides = [1, 1]} : vector<8x96xf32> to vector<8x32xf32>
    %33 = vector.shape_cast %32 : vector<8x32xf32> to vector<1x8x32xf32>
    %34 = arith.truncf %33 : vector<1x8x32xf32> to vector<1x8x32xbf16>
    %35 = vector.extract_strided_slice %31 {offsets = [0, 32], sizes = [8, 32], strides = [1, 1]} : vector<8x96xf32> to vector<8x32xf32>
    %36 = vector.shape_cast %35 : vector<8x32xf32> to vector<1x8x32xf32>
    %37 = arith.truncf %36 : vector<1x8x32xf32> to vector<1x8x32xbf16>
    %38 = vector.extract_strided_slice %31 {offsets = [0, 64], sizes = [8, 32], strides = [1, 1]} : vector<8x96xf32> to vector<8x32xf32>
    %39 = vector.shape_cast %38 : vector<8x32xf32> to vector<1x8x32xf32>
    %40 = arith.truncf %39 : vector<1x8x32xf32> to vector<1x8x32xbf16>
    %cst_15 = arith.constant dense<0.000000e+00> : vector<1x8x8xf32>
    %41 = tpu.matmul %34, %37, %cst_15 {dimension_numbers = #tpu.dot_dimension_numbers<[2], [2], [1], [1], [0, 0, 0, 1, 1, 1], [0], [0]>} : vector<1x8x32xbf16>, vector<1x8x32xbf16>, vector<1x8x8xf32> -> vector<1x8x8xf32>
    %cst_16 = arith.constant dense<0xFF800000> : vector<1x8xf32>
    %42 = vector.multi_reduction <maximumf>, %41, %cst_16 [2] : vector<1x8x8xf32> to vector<1x8xf32>
    %43 = vector.shape_cast %42 : vector<1x8xf32> to vector<1x8x1xf32>
    %44 = vector.broadcast %43 : vector<1x8x1xf32> to vector<1x8x8xf32>
    %45 = arith.subf %41, %44 : vector<1x8x8xf32>
    %46 = math.exp %45 : vector<1x8x8xf32>
    %cst_17 = arith.constant dense<0.000000e+00> : vector<1x8xf32>
    %47 = vector.multi_reduction <add>, %46, %cst_17 [2] : vector<1x8x8xf32> to vector<1x8xf32>
    %48 = vector.shape_cast %47 : vector<1x8xf32> to vector<1x8x1xf32>
    %49 = tpu.reciprocal %48 {approx = true} : vector<1x8x1xf32> -> vector<1x8x1xf32>
    %50 = vector.broadcast %49 : vector<1x8x1xf32> to vector<1x8x8xf32>
    %51 = arith.mulf %46, %50 : vector<1x8x8xf32>
    %52 = arith.truncf %51 : vector<1x8x8xf32> to vector<1x8x8xbf16>
    %cst_18 = arith.constant dense<0.000000e+00> : vector<1x8x32xf32>
    %53 = tpu.matmul %52, %40, %cst_18 {dimension_numbers = #tpu.dot_dimension_numbers<[2], [1], [1], [2], [0, 0, 0, 1, 1, 2], [0], [0]>} : vector<1x8x8xbf16>, vector<1x8x32xbf16>, vector<1x8x32xf32> -> vector<1x8x32xf32>
    %54 = vector.shape_cast %53 : vector<1x8x32xf32> to vector<8x32xf32>
    %55 = arith.truncf %54 : vector<8x32xf32> to vector<8x32xbf16>
    %c0_19 = arith.constant 0 : index
    %c0_20 = arith.constant 0 : index
    %56 = vector.load %arg6[%c0_19, %c0_20] : memref<32x32xbf16, #tpu.memory_space<vmem>>, vector<32x32xbf16>
    %cst_21 = arith.constant dense<0.000000e+00> : vector<8x32xf32>
    %57 = tpu.matmul %55, %56, %cst_21 {dimension_numbers = #tpu.dot_dimension_numbers<[1], [0], [0], [1], [0, 0, 1, 1], [], []>} : vector<8x32xbf16>, vector<32x32xbf16>, vector<8x32xf32> -> vector<8x32xf32>
    %c0_22 = arith.constant 0 : index
    %c0_23 = arith.constant 0 : index
    %58 = vector.load %arg7[%c0_22, %c0_23] : memref<1x32xf32, #tpu.memory_space<vmem>>, vector<1x32xf32>
    %59 = vector.broadcast %58 : vector<1x32xf32> to vector<8x32xf32>
    %60 = arith.addf %57, %59 : vector<8x32xf32>
    %61 = arith.addf %1, %60 : vector<8x32xf32>
    %c0_24 = arith.constant 0 : index
    %c0_25 = arith.constant 0 : index
    %62 = vector.load %arg8[%c0_24, %c0_25] : memref<1x32xf32, #tpu.memory_space<vmem>>, vector<1x32xf32>
    %c0_26 = arith.constant 0 : index
    %c0_27 = arith.constant 0 : index
    %63 = vector.load %arg9[%c0_26, %c0_27] : memref<1x32xf32, #tpu.memory_space<vmem>>, vector<1x32xf32>
    %cst_28 = arith.constant dense<0.000000e+00> : vector<8xf32>
    %64 = vector.multi_reduction <add>, %61, %cst_28 [1] : vector<8x32xf32> to vector<8xf32>
    %65 = vector.shape_cast %64 : vector<8xf32> to vector<8x1xf32>
    %cst_29 = arith.constant 3.200000e+01 : f32
    %66 = vector.broadcast %cst_29 : f32 to vector<8x1xf32>
    %67 = arith.divf %65, %66 : vector<8x1xf32>
    %68 = vector.broadcast %67 : vector<8x1xf32> to vector<8x32xf32>
    %69 = arith.subf %61, %68 : vector<8x32xf32>
    %70 = arith.mulf %69, %69 : vector<8x32xf32>
    %cst_30 = arith.constant dense<0.000000e+00> : vector<8xf32>
    %71 = vector.multi_reduction <add>, %70, %cst_30 [1] : vector<8x32xf32> to vector<8xf32>
    %72 = vector.shape_cast %71 : vector<8xf32> to vector<8x1xf32>
    %cst_31 = arith.constant 3.200000e+01 : f32
    %73 = vector.broadcast %cst_31 : f32 to vector<8x1xf32>
    %74 = arith.divf %72, %73 : vector<8x1xf32>
    %75 = vector.broadcast %67 : vector<8x1xf32> to vector<8x32xf32>
    %76 = arith.subf %61, %75 : vector<8x32xf32>
    %cst_32 = arith.constant 9.99999974E-6 : f32
    %77 = vector.broadcast %cst_32 : f32 to vector<8x1xf32>
    %78 = arith.addf %74, %77 : vector<8x1xf32>
    %79 = math.rsqrt %78 : vector<8x1xf32>
    %80 = vector.broadcast %79 : vector<8x1xf32> to vector<8x32xf32>
    %81 = arith.mulf %76, %80 : vector<8x32xf32>
    %82 = vector.broadcast %62 : vector<1x32xf32> to vector<8x32xf32>
    %83 = arith.mulf %81, %82 : vector<8x32xf32>
    %84 = vector.broadcast %63 : vector<1x32xf32> to vector<8x32xf32>
    %85 = arith.addf %83, %84 : vector<8x32xf32>
    %86 = arith.truncf %85 : vector<8x32xf32> to vector<8x32xbf16>
    %c0_33 = arith.constant 0 : index
    %c0_34 = arith.constant 0 : index
    %87 = vector.load %arg10[%c0_33, %c0_34] : memref<32x128xbf16, #tpu.memory_space<vmem>>, vector<32x128xbf16>
    %cst_35 = arith.constant dense<0.000000e+00> : vector<8x128xf32>
    %88 = tpu.matmul %86, %87, %cst_35 {dimension_numbers = #tpu.dot_dimension_numbers<[1], [0], [0], [1], [0, 0, 1, 1], [], []>} : vector<8x32xbf16>, vector<32x128xbf16>, vector<8x128xf32> -> vector<8x128xf32>
    %c0_36 = arith.constant 0 : index
    %c0_37 = arith.constant 0 : index
    %89 = vector.load %arg11[%c0_36, %c0_37] : memref<1x128xf32, #tpu.memory_space<vmem>>, vector<1x128xf32>
    %90 = vector.broadcast %89 : vector<1x128xf32> to vector<8x128xf32>
    %91 = arith.addf %88, %90 : vector<8x128xf32>
    %cst_38 = arith.constant 5.000000e-01 : f32
    %92 = vector.broadcast %cst_38 : f32 to vector<8x128xf32>
    %93 = arith.mulf %92, %91 : vector<8x128xf32>
    %cst_39 = arith.constant 4.471500e-02 : f32
    %94 = vector.broadcast %cst_39 : f32 to vector<8x128xf32>
    %95 = arith.mulf %94, %91 : vector<8x128xf32>
    %96 = arith.mulf %95, %91 : vector<8x128xf32>
    %97 = arith.mulf %96, %91 : vector<8x128xf32>
    %98 = arith.addf %91, %97 : vector<8x128xf32>
    %cst_40 = arith.constant 0.797884583 : f32
    %99 = vector.broadcast %cst_40 : f32 to vector<8x128xf32>
    %100 = arith.mulf %99, %98 : vector<8x128xf32>
    %101 = math.tanh %100 : vector<8x128xf32>
    %cst_41 = arith.constant 1.000000e+00 : f32
    %102 = vector.broadcast %cst_41 : f32 to vector<8x128xf32>
    %103 = arith.addf %102, %101 : vector<8x128xf32>
    %104 = arith.mulf %93, %103 : vector<8x128xf32>
    %105 = arith.truncf %104 : vector<8x128xf32> to vector<8x128xbf16>
    %c0_42 = arith.constant 0 : index
    %c0_43 = arith.constant 0 : index
    %106 = vector.load %arg12[%c0_42, %c0_43] : memref<128x32xbf16, #tpu.memory_space<vmem>>, vector<128x32xbf16>
    %cst_44 = arith.constant dense<0.000000e+00> : vector<8x32xf32>
    %107 = tpu.matmul %105, %106, %cst_44 {dimension_numbers = #tpu.dot_dimension_numbers<[1], [0], [0], [1], [0, 0, 1, 1], [], []>} : vector<8x128xbf16>, vector<128x32xbf16>, vector<8x32xf32> -> vector<8x32xf32>
    %c0_45 = arith.constant 0 : index
    %c0_46 = arith.constant 0 : index
    %108 = vector.load %arg13[%c0_45, %c0_46] : memref<1x32xf32, #tpu.memory_space<vmem>>, vector<1x32xf32>
    %109 = vector.broadcast %108 : vector<1x32xf32> to vector<8x32xf32>
    %110 = arith.addf %107, %109 : vector<8x32xf32>
    %111 = arith.addf %61, %110 : vector<8x32xf32>
    %112 = vector.shape_cast %111 : vector<8x32xf32> to vector<1x8x32xf32>
    %c0_47 = arith.constant 0 : index
    %c0_48 = arith.constant 0 : index
    %c0_49 = arith.constant 0 : index
    %113 = vector.load %arg14[%c0_47, %c0_48, %c0_49] : memref<1x8x32xf32, #tpu.memory_space<vmem>>, vector<1x8x32xf32>
    tpu.vector_store %arg14[%c0_47, %c0_48, %c0_49], %112 {strides = array<i32>} : memref<1x8x32xf32, #tpu.memory_space<vmem>>, vector<1x8x32xf32>,
    return
  }
  func.func @transform_0(%arg0: i32) -> (i32, i32, i32) {
    %c0_i32 = arith.constant 0 : i32
    %c0_i32_0 = arith.constant 0 : i32
    %c0_i32_1 = arith.constant 0 : i32
    return %arg0, %c0_i32, %c0_i32_0 : i32, i32, i32
  }
  func.func @transform_1(%arg0: i32) -> (i32, i32) {
    %c0_i32 = arith.constant 0 : i32
    %c0_i32_0 = arith.constant 0 : i32
    %c0_i32_1 = arith.constant 0 : i32
    return %c0_i32, %c0_i32_0 : i32, i32
  }
  func.func @transform_2(%arg0: i32) -> (i32, i32) {
    %c0_i32 = arith.constant 0 : i32
    %c0_i32_0 = arith.constant 0 : i32
    %c0_i32_1 = arith.constant 0 : i32
    return %c0_i32, %c0_i32_0 : i32, i32
  }
  func.func @transform_3(%arg0: i32) -> (i32, i32) {
    %c0_i32 = arith.constant 0 : i32
    %c0_i32_0 = arith.constant 0 : i32
    %c0_i32_1 = arith.constant 0 : i32
    return %c0_i32, %c0_i32_0 : i32, i32
  }
  func.func @transform_4(%arg0: i32) -> (i32, i32) {
    %c0_i32 = arith.constant 0 : i32
    %c0_i32_0 = arith.constant 0 : i32
    %c0_i32_1 = arith.constant 0 : i32
    return %c0_i32, %c0_i32_0 : i32, i32
  }
  func.func @transform_5(%arg0: i32) -> (i32, i32) {
    %c0_i32 = arith.constant 0 : i32
    %c0_i32_0 = arith.constant 0 : i32
    %c0_i32_1 = arith.constant 0 : i32
    return %c0_i32, %c0_i32_0 : i32, i32
  }
  func.func @transform_6(%arg0: i32) -> (i32, i32) {
    %c0_i32 = arith.constant 0 : i32
    %c0_i32_0 = arith.constant 0 : i32
    %c0_i32_1 = arith.constant 0 : i32
    return %c0_i32, %c0_i32_0 : i32, i32
  }
  func.func @transform_7(%arg0: i32) -> (i32, i32) {
    %c0_i32 = arith.constant 0 : i32
    %c0_i32_0 = arith.constant 0 : i32
    %c0_i32_1 = arith.constant 0 : i32
    return %c0_i32, %c0_i32_0 : i32, i32
  }
  func.func @transform_8(%arg0: i32) -> (i32, i32) {
    %c0_i32 = arith.constant 0 : i32
    %c0_i32_0 = arith.constant 0 : i32
    %c0_i32_1 = arith.constant 0 : i32
    return %c0_i32, %c0_i32_0 : i32, i32
  }
  func.func @transform_9(%arg0: i32) -> (i32, i32) {
    %c0_i32 = arith.constant 0 : i32
    %c0_i32_0 = arith.constant 0 : i32
    %c0_i32_1 = arith.constant 0 : i32
    return %c0_i32, %c0_i32_0 : i32, i32
  }
  func.func @transform_10(%arg0: i32) -> (i32, i32) {
    %c0_i32 = arith.constant 0 : i32
    %c0_i32_0 = arith.constant 0 : i32
    %c0_i32_1 = arith.constant 0 : i32
    return %c0_i32, %c0_i32_0 : i32, i32
  }
  func.func @transform_11(%arg0: i32) -> (i32, i32) {
    %c0_i32 = arith.constant 0 : i32
    %c0_i32_0 = arith.constant 0 : i32
    %c0_i32_1 = arith.constant 0 : i32
    return %c0_i32, %c0_i32_0 : i32, i32
  }
  func.func @transform_12(%arg0: i32) -> (i32, i32) {
    %c0_i32 = arith.constant 0 : i32
    %c0_i32_0 = arith.constant 0 : i32
    %c0_i32_1 = arith.constant 0 : i32
    return %c0_i32, %c0_i32_0 : i32, i32
  }
  func.func @transform_13(%arg0: i32) -> (i32, i32, i32) {
    %c0_i32 = arith.constant 0 : i32
    %c0_i32_0 = arith.constant 0 : i32
    %c0_i32_1 = arith.constant 0 : i32
    return %arg0, %c0_i32, %c0_i32_0 : i32, i32, i32
  }
}

</mosaic_0001>

<llo_original>
// kernel: tpu_custom_call.1
$region0: #{tpu_custom_call.1}
  #allocation0 [shape = 'u32[]', space=smem, size = 0x4, offset = 0x4, fixed_abs, tag = 'smem constant byte address 0x4 - core index']
  #allocation1 [shape = 'u32[72,128]{1,0:T(1,128)}', space=vmem, size = 0x9000, scoped, tag = 'internal scratch']
  %s0 = inlined_call_operand.vmem [shape: f32[2,8,32], index: 0, kind: input, shape index: {}]
  %s1 = inlined_call_operand.vmem [shape: f32[1,32], index: 1, kind: input, shape index: {}]
  %s2 = inlined_call_operand.vmem [shape: f32[1,32], index: 2, kind: input, shape index: {}]
  %s3 = inlined_call_operand.vmem [shape: bf16[32,96], index: 3, kind: input, shape index: {}]
  %s4 = inlined_call_operand.vmem [shape: f32[1,96], index: 4, kind: input, shape index: {}]
  %s5 = inlined_call_operand.vmem [shape: bf16[32,32], index: 5, kind: input, shape index: {}]
  %s6 = inlined_call_operand.vmem [shape: f32[1,32], index: 6, kind: input, shape index: {}]
  %s7 = inlined_call_operand.vmem [shape: f32[1,32], index: 7, kind: input, shape index: {}]
  %s8 = inlined_call_operand.vmem [shape: f32[1,32], index: 8, kind: input, shape index: {}]
  %s9 = inlined_call_operand.vmem [shape: bf16[32,128], index: 9, kind: input, shape index: {}]
  %s10 = inlined_call_operand.vmem [shape: f32[1,128], index: 10, kind: input, shape index: {}]
  %s11 = inlined_call_operand.vmem [shape: bf16[128,32], index: 11, kind: input, shape index: {}]
  %s12 = inlined_call_operand.vmem [shape: f32[1,32], index: 12, kind: input, shape index: {}]
  %s13 = inlined_call_operand.hbm [shape: f32[2,8,32], index: 13, kind: output, shape index: {}]
  %s14 = sld [smem:[#allocation0]]
  $region85: #{tpu_custom_call.1} parent=0
    _
  %s16 = ssub.s32 1, %s14
  %s17 = scalar_select 0, %s16, %s14
  $region1: #{tpu_custom_call.1} parent=0
    #allocation2 [shape = 'u8[8192]{0}', space=vmem, size = 0x2000, scoped, tag = 'output window, operand 0']
    #allocation3 [shape = 's32[2]{0}', space=sflag, size = 0x8, scoped, tag = 'scoped memory for tpu_custom_call.1']
    %18 = vsyncpa [#allocation3], 0
    %s19 = scalar_lea.sflag [#allocation3], 1
    %20 = vsyncpa %s19, 0
    loop: start=0, step=1, limit=4
    $region2: #{tpu_custom_call.1} parent=1 // loop_pre_header
      _
    $region3: #{tpu_custom_call.1} parent=1 // loop_header
      %s22 = sphi 0, %s26
      %p23 = scmp.ge.s32.totalorder %s22, 4
      %s32 = sphi 0, %s34
      %s35 = sphi 0, %s32
      %s36 = sphi 0, %s35
      %s52 = sphi 0, %s36
      %s56 = sphi 0, %s56
      %s58 = sphi 0, %s56
      %s59 = sphi 0, %s58
      %s73 = sphi 0, %s59
      %s77 = sphi 0, %s77
      %s79 = sphi 0, %s77
      %s80 = sphi 0, %s79
      %s94 = sphi 0, %s80
      %s98 = sphi 0, %s98
      %s100 = sphi 0, %s98
      %s101 = sphi 0, %s100
      %s115 = sphi 0, %s101
      %s119 = sphi 0, %s119
      %s121 = sphi 0, %s119
      %s122 = sphi 0, %s121
      %s136 = sphi 0, %s122
      %s140 = sphi 0, %s140
      %s142 = sphi 0, %s140
      %s143 = sphi 0, %s142
      %s157 = sphi 0, %s143
      %s161 = sphi 0, %s161
      %s163 = sphi 0, %s161
      %s164 = sphi 0, %s163
      %s178 = sphi 0, %s164
      %s182 = sphi 0, %s182
      %s184 = sphi 0, %s182
      %s185 = sphi 0, %s184
      %s199 = sphi 0, %s185
      %s203 = sphi 0, %s203
      %s205 = sphi 0, %s203
      %s206 = sphi 0, %s205
      %s220 = sphi 0, %s206
      %s224 = sphi 0, %s224
      %s226 = sphi 0, %s224
      %s227 = sphi 0, %s226
      %s241 = sphi 0, %s227
      %s245 = sphi 0, %s245
      %s247 = sphi 0, %s245
      %s248 = sphi 0, %s247
      %s262 = sphi 0, %s248
      %s266 = sphi 0, %s266
      %s268 = sphi 0, %s266
      %s269 = sphi 0, %s268
      %s283 = sphi 0, %s269
      %s287 = sphi 0, %s287
      %s289 = sphi 0, %s287
      %s290 = sphi 0, %s289
      %s304 = sphi 0, %s290
      %s310 = sphi 0, %s312
      %s313 = sphi 0, %s310
      %s314 = sphi 0, %s313
      %s330 = sphi 0, %s314
    $region4: #{tpu_custom_call.1} parent=1 // loop_header_branch
      %25 = sbr.rel (%p23) target = $region8
    $region5: #{tpu_custom_call.1} parent=1 // loop_body
      %s27 = ssub.s32 %s22, 1
      %s28 = ssub.s32 %s22, 2
      %s29 = sadd.s32 %s22, 1
      %s30 = ssub.s32 %s22, %s29
      %p31 = scmp.eq.s32.totalorder %s30, 0
      %s33 = sadd.s32 %s32, 1
      %s34 = scalar_select %p31, %s32, %s33
      %p37 = pneg %p31
      %p38 = scmp.eq.s32.totalorder %s22, 1
      %p39 = por %p37, %p38
      %p40 = scmp.ne.s32.totalorder %s32, %s35
      %p41 = scmp.eq.s32.totalorder %s22, 0
      %p42 = por %p40, %p41
      %p43 = scmp.ne.s32.totalorder %s32, %s35
      %p44 = scmp.eq.s32.totalorder %s27, 1
      %p45 = por %p43, %p44
      %p46 = scmp.ne.s32.totalorder %s35, %s36
      %p47 = scmp.eq.s32.totalorder %s27, 0
      %p48 = por %p46, %p47
      %p49 = scmp.ne.s32.totalorder %s35, %s36
      %p50 = scmp.eq.s32.totalorder %s28, 1
      %p51 = por %p49, %p50
      %p53 = scmp.ne.s32.totalorder %s36, %s52
      %p54 = scmp.eq.s32.totalorder %s28, 0
      %p55 = por %p53, %p54
      %s57 = sadd.s32 %s56, 1
      %p60 = scmp.eq.s32.totalorder %s22, 1
      %p61 = scmp.ne.s32.totalorder %s56, %s58
      %p62 = scmp.eq.s32.totalorder %s22, 0
      %p63 = por %p61, %p62
      %p64 = scmp.ne.s32.totalorder %s56, %s58
      %p65 = scmp.eq.s32.totalorder %s27, 1
      %p66 = por %p64, %p65
      %p67 = scmp.ne.s32.totalorder %s58, %s59
      %p68 = scmp.eq.s32.totalorder %s27, 0
      %p69 = por %p67, %p68
      %p70 = scmp.ne.s32.totalorder %s58, %s59
      %p71 = scmp.eq.s32.totalorder %s28, 1
      %p72 = por %p70, %p71
      %p74 = scmp.ne.s32.totalorder %s59, %s73
      %p75 = scmp.eq.s32.totalorder %s28, 0
      %p76 = por %p74, %p75
      %s78 = sadd.s32 %s77, 1
      %p81 = scmp.eq.s32.totalorder %s22, 1
      %p82 = scmp.ne.s32.totalorder %s77, %s79
      %p83 = scmp.eq.s32.totalorder %s22, 0
      %p84 = por %p82, %p83
      %p85 = scmp.ne.s32.totalorder %s77, %s79
      %p86 = scmp.eq.s32.totalorder %s27, 1
      %p87 = por %p85, %p86
      %p88 = scmp.ne.s32.totalorder %s79, %s80
      %p89 = scmp.eq.s32.totalorder %s27, 0
      %p90 = por %p88, %p89
      %p91 = scmp.ne.s32.totalorder %s79, %s80
      %p92 = scmp.eq.s32.totalorder %s28, 1
      %p93 = por %p91, %p92
      %p95 = scmp.ne.s32.totalorder %s80, %s94
      %p96 = scmp.eq.s32.totalorder %s28, 0
      %p97 = por %p95, %p96
      %s99 = sadd.s32 %s98, 1
      %p102 = scmp.eq.s32.totalorder %s22, 1
      %p103 = scmp.ne.s32.totalorder %s98, %s100
      %p104 = scmp.eq.s32.totalorder %s22, 0
      %p105 = por %p103, %p104
      %p106 = scmp.ne.s32.totalorder %s98, %s100
      %p107 = scmp.eq.s32.totalorder %s27, 1
      %p108 = por %p106, %p107
      %p109 = scmp.ne.s32.totalorder %s100, %s101
      %p110 = scmp.eq.s32.totalorder %s27, 0
      %p111 = por %p109, %p110
      %p112 = scmp.ne.s32.totalorder %s100, %s101
      %p113 = scmp.eq.s32.totalorder %s28, 1
      %p114 = por %p112, %p113
      %p116 = scmp.ne.s32.totalorder %s101, %s115
      %p117 = scmp.eq.s32.totalorder %s28, 0
      %p118 = por %p116, %p117
      %s120 = sadd.s32 %s119, 1
      %p123 = scmp.eq.s32.totalorder %s22, 1
      %p124 = scmp.ne.s32.totalorder %s119, %s121
      %p125 = scmp.eq.s32.totalorder %s22, 0
      %p126 = por %p124, %p125
      %p127 = scmp.ne.s32.totalorder %s119, %s121
      %p128 = scmp.eq.s32.totalorder %s27, 1
      %p129 = por %p127, %p128
      %p130 = scmp.ne.s32.totalorder %s121, %s122
      %p131 = scmp.eq.s32.totalorder %s27, 0
      %p132 = por %p130, %p131
      %p133 = scmp.ne.s32.totalorder %s121, %s122
      %p134 = scmp.eq.s32.totalorder %s28, 1
      %p135 = por %p133, %p134
      %p137 = scmp.ne.s32.totalorder %s122, %s136
      %p138 = scmp.eq.s32.totalorder %s28, 0
      %p139 = por %p137, %p138
      %s141 = sadd.s32 %s140, 1
      %p144 = scmp.eq.s32.totalorder %s22, 1
      %p145 = scmp.ne.s32.totalorder %s140, %s142
      %p146 = scmp.eq.s32.totalorder %s22, 0
      %p147 = por %p145, %p146
      %p148 = scmp.ne.s32.totalorder %s140, %s142
      %p149 = scmp.eq.s32.totalorder %s27, 1
      %p150 = por %p148, %p149
      %p151 = scmp.ne.s32.totalorder %s142, %s143
      %p152 = scmp.eq.s32.totalorder %s27, 0
      %p153 = por %p151, %p152
      %p154 = scmp.ne.s32.totalorder %s142, %s143
      %p155 = scmp.eq.s32.totalorder %s28, 1
      %p156 = por %p154, %p155
      %p158 = scmp.ne.s32.totalorder %s143, %s157
      %p159 = scmp.eq.s32.totalorder %s28, 0
      %p160 = por %p158, %p159
      %s162 = sadd.s32 %s161, 1
      %p165 = scmp.eq.s32.totalorder %s22, 1
      %p166 = scmp.ne.s32.totalorder %s161, %s163
      %p167 = scmp.eq.s32.totalorder %s22, 0
      %p168 = por %p166, %p167
      %p169 = scmp.ne.s32.totalorder %s161, %s163
      %p170 = scmp.eq.s32.totalorder %s27, 1
      %p171 = por %p169, %p170
      %p172 = scmp.ne.s32.totalorder %s163, %s164
      %p173 = scmp.eq.s32.totalorder %s27, 0
      %p174 = por %p172, %p173
      %p175 = scmp.ne.s32.totalorder %s163, %s164
      %p176 = scmp.eq.s32.totalorder %s28, 1
      %p177 = por %p175, %p176
      %p179 = scmp.ne.s32.totalorder %s164, %s178
      %p180 = scmp.eq.s32.totalorder %s28, 0
      %p181 = por %p179, %p180
      %s183 = sadd.s32 %s182, 1
      %p186 = scmp.eq.s32.totalorder %s22, 1
      %p187 = scmp.ne.s32.totalorder %s182, %s184
      %p188 = scmp.eq.s32.totalorder %s22, 0
      %p189 = por %p187, %p188
      %p190 = scmp.ne.s32.totalorder %s182, %s184
      %p191 = scmp.eq.s32.totalorder %s27, 1
      %p192 = por %p190, %p191
      %p193 = scmp.ne.s32.totalorder %s184, %s185
      %p194 = scmp.eq.s32.totalorder %s27, 0
      %p195 = por %p193, %p194
      %p196 = scmp.ne.s32.totalorder %s184, %s185
      %p197 = scmp.eq.s32.totalorder %s28, 1
      %p198 = por %p196, %p197
      %p200 = scmp.ne.s32.totalorder %s185, %s199
      %p201 = scmp.eq.s32.totalorder %s28, 0
      %p202 = por %p200, %p201
      %s204 = sadd.s32 %s203, 1
      %p207 = scmp.eq.s32.totalorder %s22, 1
      %p208 = scmp.ne.s32.totalorder %s203, %s205
      %p209 = scmp.eq.s32.totalorder %s22, 0
      %p210 = por %p208, %p209
      %p211 = scmp.ne.s32.totalorder %s203, %s205
      %p212 = scmp.eq.s32.totalorder %s27, 1
      %p213 = por %p211, %p212
      %p214 = scmp.ne.s32.totalorder %s205, %s206
      %p215 = scmp.eq.s32.totalorder %s27, 0
      %p216 = por %p214, %p215
      %p217 = scmp.ne.s32.totalorder %s205, %s206
      %p218 = scmp.eq.s32.totalorder %s28, 1
      %p219 = por %p217, %p218
      %p221 = scmp.ne.s32.totalorder %s206, %s220
      %p222 = scmp.eq.s32.totalorder %s28, 0
      %p223 = por %p221, %p222
      %s225 = sadd.s32 %s224, 1
      %p228 = scmp.eq.s32.totalorder %s22, 1
      %p229 = scmp.ne.s32.totalorder %s224, %s226
      %p230 = scmp.eq.s32.totalorder %s22, 0
      %p231 = por %p229, %p230
      %p232 = scmp.ne.s32.totalorder %s224, %s226
      %p233 = scmp.eq.s32.totalorder %s27, 1
      %p234 = por %p232, %p233
      %p235 = scmp.ne.s32.totalorder %s226, %s227
      %p236 = scmp.eq.s32.totalorder %s27, 0
      %p237 = por %p235, %p236
      %p238 = scmp.ne.s32.totalorder %s226, %s227
      %p239 = scmp.eq.s32.totalorder %s28, 1
      %p240 = por %p238, %p239
      %p242 = scmp.ne.s32.totalorder %s227, %s241
      %p243 = scmp.eq.s32.totalorder %s28, 0
      %p244 = por %p242, %p243
      %s246 = sadd.s32 %s245, 1
      %p249 = scmp.eq.s32.totalorder %s22, 1
      %p250 = scmp.ne.s32.totalorder %s245, %s247
      %p251 = scmp.eq.s32.totalorder %s22, 0
      %p252 = por %p250, %p251
      %p253 = scmp.ne.s32.totalorder %s245, %s247
      %p254 = scmp.eq.s32.totalorder %s27, 1
      %p255 = por %p253, %p254
      %p256 = scmp.ne.s32.totalorder %s247, %s248
      %p257 = scmp.eq.s32.totalorder %s27, 0
      %p258 = por %p256, %p257
      %p259 = scmp.ne.s32.totalorder %s247, %s248
      %p260 = scmp.eq.s32.totalorder %s28, 1
      %p261 = por %p259, %p260
      %p263 = scmp.ne.s32.totalorder %s248, %s262
      %p264 = scmp.eq.s32.totalorder %s28, 0
      %p265 = por %p263, %p264
      %s267 = sadd.s32 %s266, 1
      %p270 = scmp.eq.s32.totalorder %s22, 1
      %p271 = scmp.ne.s32.totalorder %s266, %s268
      %p272 = scmp.eq.s32.totalorder %s22, 0
      %p273 = por %p271, %p272
      %p274 = scmp.ne.s32.totalorder %s266, %s268
      %p275 = scmp.eq.s32.totalorder %s27, 1
      %p276 = por %p274, %p275
      %p277 = scmp.ne.s32.totalorder %s268, %s269
      %p278 = scmp.eq.s32.totalorder %s27, 0
      %p279 = por %p277, %p278
      %p280 = scmp.ne.s32.totalorder %s268, %s269
      %p281 = scmp.eq.s32.totalorder %s28, 1
      %p282 = por %p280, %p281
      %p284 = scmp.ne.s32.totalorder %s269, %s283
      %p285 = scmp.eq.s32.totalorder %s28, 0
      %p286 = por %p284, %p285
      %s288 = sadd.s32 %s287, 1
      %p291 = scmp.eq.s32.totalorder %s22, 1
      %p292 = scmp.ne.s32.totalorder %s287, %s289
      %p293 = scmp.eq.s32.totalorder %s22, 0
      %p294 = por %p292, %p293
      %p295 = scmp.ne.s32.totalorder %s287, %s289
      %p296 = scmp.eq.s32.totalorder %s27, 1
      %p297 = por %p295, %p296
      %p298 = scmp.ne.s32.totalorder %s289, %s290
      %p299 = scmp.eq.s32.totalorder %s27, 0
      %p300 = por %p298, %p299
      %p301 = scmp.ne.s32.totalorder %s289, %s290
      %p302 = scmp.eq.s32.totalorder %s28, 1
      %p303 = por %p301, %p302
      %p305 = scmp.ne.s32.totalorder %s290, %s304
      %p306 = scmp.eq.s32.totalorder %s28, 0
      %p307 = por %p305, %p306
      %s308 = ssub.s32 %s22, %s29
      %p309 = scmp.eq.s32.totalorder %s308, 0
      %s311 = sadd.s32 %s310, 1
      %s312 = scalar_select %p309, %s310, %s311
      %p315 = pneg %p309
      %p316 = scmp.eq.s32.totalorder %s22, 1
      %p317 = por %p315, %p316
      %p318 = scmp.ne.s32.totalorder %s310, %s313
      %p319 = scmp.eq.s32.totalorder %s22, 0
      %p320 = por %p318, %p319
      %p321 = scmp.ne.s32.totalorder %s310, %s313
      %p322 = scmp.eq.s32.totalorder %s27, 1
      %p323 = por %p321, %p322
      %p324 = scmp.ne.s32.totalorder %s313, %s314
      %p325 = scmp.eq.s32.totalorder %s27, 0
      %p326 = por %p324, %p325
      %p327 = scmp.ne.s32.totalorder %s313, %s314
      %p328 = scmp.eq.s32.totalorder %s28, 1
      %p329 = por %p327, %p328
      %p331 = scmp.ne.s32.totalorder %s314, %s330
      %p332 = scmp.eq.s32.totalorder %s28, 0
      %p333 = por %p331, %p332
      %p334 = scmp.le.s32.totalorder 1, %s22
      %p335 = scmp.lt.s32.totalorder %s22, 3
      %p336 = pnand %p334, %p335
      %p337 = pneg %p336
      // Predicated region
      $region9: #{tpu_custom_call.1} parent=5 // pred_check
        _
      $region10: #{tpu_custom_call.1} parent=5 // pred_check_branch
        %339 = sbr.rel (%p336) target = $region12
      $region11: #{tpu_custom_call.1} parent=5 // pred_region
        %s340 = ssub.s32 %s22, 1
        // Predicated region
        $region13: #{tpu_custom_call.1} parent=11 // pred_check
          %p341 = pneg %p69
        $region14: #{tpu_custom_call.1} parent=11 // pred_check_branch
          %343 = sbr.rel (%p341) target = $region16
        $region15: #{tpu_custom_call.1} parent=11 // pred_region
          _
        $region16: #{tpu_custom_call.1} parent=11 // pred_fallthru
          _
        // Predicated region
        $region17: #{tpu_custom_call.1} parent=11 // pred_check
          %p344 = pneg %p90
        $region18: #{tpu_custom_call.1} parent=11 // pred_check_branch
          %346 = sbr.rel (%p344) target = $region20
        $region19: #{tpu_custom_call.1} parent=11 // pred_region
          _
        $region20: #{tpu_custom_call.1} parent=11 // pred_fallthru
          _
        // Predicated region
        $region21: #{tpu_custom_call.1} parent=11 // pred_check
          %p347 = pneg %p111
        $region22: #{tpu_custom_call.1} parent=11 // pred_check_branch
          %349 = sbr.rel (%p347) target = $region24
        $region23: #{tpu_custom_call.1} parent=11 // pred_region
          _
        $region24: #{tpu_custom_call.1} parent=11 // pred_fallthru
          _
        // Predicated region
        $region25: #{tpu_custom_call.1} parent=11 // pred_check
          %p350 = pneg %p132
        $region26: #{tpu_custom_call.1} parent=11 // pred_check_branch
          %352 = sbr.rel (%p350) target = $region28
        $region27: #{tpu_custom_call.1} parent=11 // pred_region
          _
        $region28: #{tpu_custom_call.1} parent=11 // pred_fallthru
          _
        // Predicated region
        $region29: #{tpu_custom_call.1} parent=11 // pred_check
          %p353 = pneg %p153
        $region30: #{tpu_custom_call.1} parent=11 // pred_check_branch
          %355 = sbr.rel (%p353) target = $region32
        $region31: #{tpu_custom_call.1} parent=11 // pred_region
          _
        $region32: #{tpu_custom_call.1} parent=11 // pred_fallthru
          _
        // Predicated region
        $region33: #{tpu_custom_call.1} parent=11 // pred_check
          %p356 = pneg %p174
        $region34: #{tpu_custom_call.1} parent=11 // pred_check_branch
          %358 = sbr.rel (%p356) target = $region36
        $region35: #{tpu_custom_call.1} parent=11 // pred_region
          _
        $region36: #{tpu_custom_call.1} parent=11 // pred_fallthru
          _
        // Predicated region
        $region37: #{tpu_custom_call.1} parent=11 // pred_check
          %p359 = pneg %p195
        $region38: #{tpu_custom_call.1} parent=11 // pred_check_branch
          %361 = sbr.rel (%p359) target = $region40
        $region39: #{tpu_custom_call.1} parent=11 // pred_region
          _
        $region40: #{tpu_custom_call.1} parent=11 // pred_fallthru
          _
        // Predicated region
        $region41: #{tpu_custom_call.1} parent=11 // pred_check
          %p362 = pneg %p216
        $region42: #{tpu_custom_call.1} parent=11 // pred_check_branch
          %364 = sbr.rel (%p362) target = $region44
        $region43: #{tpu_custom_call.1} parent=11 // pred_region
          _
        $region44: #{tpu_custom_call.1} parent=11 // pred_fallthru
          _
        // Predicated region
        $region45: #{tpu_custom_call.1} parent=11 // pred_check
          %p365 = pneg %p237
        $region46: #{tpu_custom_call.1} parent=11 // pred_check_branch
          %367 = sbr.rel (%p365) target = $region48
        $region47: #{tpu_custom_call.1} parent=11 // pred_region
          _
        $region48: #{tpu_custom_call.1} parent=11 // pred_fallthru
          _
        // Predicated region
        $region49: #{tpu_custom_call.1} parent=11 // pred_check
          %p368 = pneg %p258
        $region50: #{tpu_custom_call.1} parent=11 // pred_check_branch
          %370 = sbr.rel (%p368) target = $region52
        $region51: #{tpu_custom_call.1} parent=11 // pred_region
          _
        $region52: #{tpu_custom_call.1} parent=11 // pred_fallthru
          _
        // Predicated region
        $region53: #{tpu_custom_call.1} parent=11 // pred_check
          %p371 = pneg %p279
        $region54: #{tpu_custom_call.1} parent=11 // pred_check_branch
          %373 = sbr.rel (%p371) target = $region56
        $region55: #{tpu_custom_call.1} parent=11 // pred_region
          _
        $region56: #{tpu_custom_call.1} parent=11 // pred_fallthru
          _
        // Predicated region
        $region57: #{tpu_custom_call.1} parent=11 // pred_check
          %p374 = pneg %p300
        $region58: #{tpu_custom_call.1} parent=11 // pred_check_branch
          %376 = sbr.rel (%p374) target = $region60
        $region59: #{tpu_custom_call.1} parent=11 // pred_region
          _
        $region60: #{tpu_custom_call.1} parent=11 // pred_fallthru
          _
      $region12: #{tpu_custom_call.1} parent=5 // pred_fallthru
        _
      %p377 = scmp.lt.s32.totalorder %s22, 2
      // Predicated region
      $region61: #{tpu_custom_call.1} parent=5 // pred_check
        %p378 = pneg %p377
      $region62: #{tpu_custom_call.1} parent=5 // pred_check_branch
        %380 = sbr.rel (%p378) target = $region64
      $region63: #{tpu_custom_call.1} parent=5 // pred_region
        // Predicated region
        $region65: #{tpu_custom_call.1} parent=63 // pred_check
          %p381 = pneg %p42
        $region66: #{tpu_custom_call.1} parent=63 // pred_check_branch
          %383 = sbr.rel (%p381) target = $region68
        $region67: #{tpu_custom_call.1} parent=63 // pred_region
          %p384 = scmp.lt.s32.totalorder %s22, 1
          %s385 = scalar_select %p384, %s22, 1
          %s386 = smul.addr %s385, 8
          %s387 = scalar_lea.vmem %s0, %s386
        $region68: #{tpu_custom_call.1} parent=63 // pred_fallthru
          _
      $region64: #{tpu_custom_call.1} parent=5 // pred_fallthru
        _
      %p388 = scmp.le.s32.totalorder 1, %s22
      %p389 = scmp.lt.s32.totalorder %s22, 3
      %p390 = pnand %p388, %p389
      %p391 = pneg %p390
      // Predicated region
      $region69: #{tpu_custom_call.1} parent=5 // pred_check
        _
      $region70: #{tpu_custom_call.1} parent=5 // pred_check_branch
        %393 = sbr.rel (%p390) target = $region72
      $region71: #{tpu_custom_call.1} parent=5 // pred_region
        %s394 = ssub.s32 %s22, 1
        %p395 = scmp.lt.s32.totalorder %s27, 1
        %s396 = scalar_select %p395, %s27, 1
        %s397 = smul.addr %s396, 8
        %s398 = scalar_lea.vmem %s0, %s397
        %p399 = pneg %p48
        %p400 = pneg %p45
        %p401 = pneg %p69
        %p402 = pneg %p66
        %p403 = pneg %p90
        %p404 = pneg %p87
        %p405 = pneg %p111
        %p406 = pneg %p108
        %p407 = pneg %p132
        %p408 = pneg %p129
        %p409 = pneg %p153
        %p410 = pneg %p150
        %p411 = pneg %p174
        %p412 = pneg %p171
        %p413 = pneg %p195
        %p414 = pneg %p192
        %p415 = pneg %p216
        %p416 = pneg %p213
        %p417 = pneg %p237
        %p418 = pneg %p234
        %p419 = pneg %p258
        %p420 = pneg %p255
        %p421 = pneg %p279
        %p422 = pneg %p276
        %p423 = pneg %p300
        %p424 = pneg %p297
        %p425 = pneg %p326
        %p426 = pneg %p323
        %s427 = sand.u32 %s313, 1
        %s428 = scalar_lea.sflag [#allocation3], %s427
        %s429 = sand.u32 %s313, 1
        %s430 = smul.addr %s429, 8
        %s431 = scalar_lea.vmem [#allocation2], %s430
        %p432 = scmp.lt.s32.totalorder %s27, 1
        %s433 = scalar_select %p432, %s27, 1
        %s434 = smul.addr %s433, 8
        %s435 = scalar_lea.vmem %s0, %s434
        %v437 = vld [vmem:[%s435] sm:$0xff]
        %v438 = vld [vmem:[%s1] sm:$0x1]
        %v439 = vld [vmem:[%s2] sm:$0x1]
        %vm440 = vcmask 261120
        %v441 = vsel %vm440, %v437, 0.0
        %442 = vadd.xlane.f32.xlu0 %v441
        %v443 = vpop.xlane.xlu0 %442
        %v444 = vrcp.pop 32.0
        %v445 = vmul.f32 32.0, %v444
        %v446 = vsub.f32 1.0, %v445
        %v447 = vmul.f32 %v444, %v446
        %v448 = vadd.f32 %v444, %v447
        %vm449 = vweird.f32 %v444
        %v450 = vsel %vm449, %v444, %v448
        %v451 = vmul.f32 %v443, %v450
        %v452 = vsub.f32 %v437, %v451
        %v453 = vmul.f32 %v452, %v452
        %v454 = vsel %vm440, %v453, 0.0
        %455 = vadd.xlane.f32.xlu0 %v454
        %v456 = vpop.xlane.xlu0 %455
        %v457 = vmul.f32 %v456, %v450
        %v458 = vadd.f32 %v457, 1e-05
        %v459 = vrsqrt.pop %v458
        %v460 = vmul.f32 %v459, %v458
        %v461 = vmul.f32 %v460, %v459
        %v462 = vmul.f32 0.5, %v461
        %v463 = vsub.f32 1.5, %v462
        %v464 = vmul.f32 %v459, %v463
        %vm465 = vweird.f32 %v458
        %vm466 = vweird.f32 %v459
        %vm467 = vmor %vm465, %vm466
        %v468 = vsel %vm467, %v459, %v464
        %v469 = vmul.f32 %v452, %v468
        %v471 = vperm.slane %v438, 0
        %v473 = vmul.f32 %v469, %v471
        %v475 = vperm.slane %v439, 0
        %v477 = vadd.f32 %v473, %v475
        %v478 = vpack.c.bf16 %v477, %v477
        %v479 = vld [vmem:[%s3] sm:$0xf]
        %v480 = vld [vmem:[%s3 + $0x4] sm:$0xf]
        %v481 = vld [vmem:[%s3 + $0x8] sm:$0xf]
        %v482 = vld [vmem:[%s3 + $0xc] sm:$0xf]
        %v483 = vld [vmem:[%s4] sm:$0x1]
        %v485 = vperm.slane %v483, 0
        %v491 = vunpack.c.l.b16 %v479
        %v492 = vunpack.c.l.b16 %v480
        %v493 = vunpack.c.l.b16 %v481
        %v494 = vunpack.c.l.b16 %v482
        %v495 = vpack.c.b16 %v492, %v491
        %v496 = vpack.c.b16 %v494, %v493
        %v500 = vsel %vm440, %v478, 0
        %502 = vmatpush.bf16.msra.mxu0 0
        %503 = vmatpush.bf16.msra.mxu0 0
        %504 = vmatpush.bf16.msra.mxu0 0
        %505 = vmatpush.bf16.msra.mxu0 0
        %506 = vmatpush.bf16.msra.mxu0 0
        %507 = vmatpush.bf16.msra.mxu0 0
        %508 = vmatpush.bf16.msra.mxu0 %v496
        %509 = vmatpush.bf16.msra.mxu0 %v495
        %510 = vmatmul.bf16.gmra.mxu0 %v500
        %v511 = vpop.f32.mrf.mxu0
        %v512 = vadd.f32 %v485, %v511
        %v513 = vpop.f32.mrf.mxu0
        %514 = vdwg.mxu0
        %v515 = vpack.c.bf16 %v512, %v512
        %v517 = vunpack.c.l.b16 %v515
        %v518 = vpack.c.b16 %v517, %v517
        %519 = vrot.lane.b32.xlu0 %v518, 96
        %v520 = vpop.permute.xlu0 %519
        %v522 = vsel %vm440, %v515, 0
        %v525 = vsel %vm440, %v520, 0
        %527 = vmatpush.bf16.xpose.msra.mxu0 0
        %528 = vmatpush.bf16.xpose.msra.mxu0 0
        %529 = vmatpush.bf16.xpose.msra.mxu0 0
        %530 = vmatpush.bf16.xpose.msra.mxu0 0
        %531 = vmatpush.bf16.xpose.msra.mxu0 0
        %532 = vmatpush.bf16.xpose.msra.mxu0 0
        %533 = vmatpush.bf16.xpose.msra.mxu0 0
        %534 = vmatpush.bf16.xpose.msra.mxu0 %v525
        %535 = vmatmul.bf16.gmra.mxu0 %v522
        %v536 = vpop.f32.mrf.mxu0
        %v537 = vadd.f32 0.0, %v536
        %v538 = vpop.f32.mrf.mxu0
        %539 = vdwg.mxu0
        %vm540 = vcmask 64512
        %v541 = vsel %vm540, %v537, -inf
        %542 = vmax.xlane.f32.xlu0 %v541
        %v543 = vpop.xlane.xlu0 %542
        %v544 = vsub.f32 %v537, %v543
        %v545 = vmul.f32 %v544, 1.442695
        %v546 = vpow.pop %v545
        %v547 = vsel %vm540, %v546, 0.0
        %548 = vadd.xlane.f32.xlu0 %v547
        %v549 = vpop.xlane.xlu0 %548
        %v550 = vrcp.pop %v549
        %v551 = vmul.f32 %v546, %v550
        %v552 = vpack.c.bf16 %v551, %v551
        %553 = vrot.lane.b32.xlu0 %v518, 64
        %v554 = vpop.permute.xlu0 %553
        %v556 = vsel %vm540, %v552, 0
        %vm558 = vcmask 1043456
        %v560 = vsel %vm558, %v554, 0
        %562 = vmatpush.bf16.msra.mxu0 0
        %563 = vmatpush.bf16.msra.mxu0 0
        %564 = vmatpush.bf16.msra.mxu0 0
        %565 = vmatpush.bf16.msra.mxu0 0
        %566 = vmatpush.bf16.msra.mxu0 0
        %567 = vmatpush.bf16.msra.mxu0 0
        %568 = vmatpush.bf16.msra.mxu0 0
        %569 = vmatpush.bf16.msra.mxu0 %v560
        %570 = vmatmul.bf16.gmra.mxu0 %v556
        %v571 = vpop.f32.mrf.mxu0
        %v572 = vadd.f32 0.0, %v571
        %v573 = vpop.f32.mrf.mxu0
        %574 = vdwg.mxu0
        %v575 = vpack.c.bf16 %v572, %v572
        %v576 = vld [vmem:[%s5] sm:$0xf]
        %v577 = vld [vmem:[%s5 + $0x4] sm:$0xf]
        %v578 = vld [vmem:[%s5 + $0x8] sm:$0xf]
        %v579 = vld [vmem:[%s5 + $0xc] sm:$0xf]
        %v580 = vld [vmem:[%s6] sm:$0x1]
        %v582 = vperm.slane %v580, 0
        %v588 = vunpack.c.l.b16 %v576
        %v589 = vunpack.c.l.b16 %v577
        %v590 = vunpack.c.l.b16 %v578
        %v591 = vunpack.c.l.b16 %v579
        %v592 = vpack.c.b16 %v589, %v588
        %v593 = vpack.c.b16 %v591, %v590
        %v597 = vsel %vm440, %v575, 0
        %599 = vmatpush.bf16.msra.mxu0 0
        %600 = vmatpush.bf16.msra.mxu0 0
        %601 = vmatpush.bf16.msra.mxu0 0
        %602 = vmatpush.bf16.msra.mxu0 0
        %603 = vmatpush.bf16.msra.mxu0 0
        %604 = vmatpush.bf16.msra.mxu0 0
        %605 = vmatpush.bf16.msra.mxu0 %v593
        %606 = vmatpush.bf16.msra.mxu0 %v592
        %607 = vmatmul.bf16.gmra.mxu0 %v597
        %v608 = vpop.f32.mrf.mxu0
        %v609 = vadd.f32 %v582, %v608
        %v610 = vpop.f32.mrf.mxu0
        %611 = vdwg.mxu0
        %v612 = vadd.f32 %v437, %v609
        %v613 = vld [vmem:[%s7] sm:$0x1]
        %v614 = vld [vmem:[%s8] sm:$0x1]
        %v615 = vsel %vm440, %v612, 0.0
        %616 = vadd.xlane.f32.xlu0 %v615
        %v617 = vpop.xlane.xlu0 %616
        %v618 = vmul.f32 %v617, %v450
        %v619 = vsub.f32 %v612, %v618
        %v620 = vmul.f32 %v619, %v619
        %v621 = vsel %vm440, %v620, 0.0
        %622 = vadd.xlane.f32.xlu0 %v621
        %v623 = vpop.xlane.xlu0 %622
        %v624 = vmul.f32 %v623, %v450
        %v625 = vadd.f32 %v624, 1e-05
        %v626 = vrsqrt.pop %v625
        %v627 = vmul.f32 %v626, %v625
        %v628 = vmul.f32 %v627, %v626
        %v629 = vmul.f32 0.5, %v628
        %v630 = vsub.f32 1.5, %v629
        %v631 = vmul.f32 %v626, %v630
        %vm632 = vweird.f32 %v625
        %vm633 = vweird.f32 %v626
        %vm634 = vmor %vm632, %vm633
        %v635 = vsel %vm634, %v626, %v631
        %v636 = vmul.f32 %v619, %v635
        %v638 = vperm.slane %v613, 0
        %v640 = vmul.f32 %v636, %v638
        %v642 = vperm.slane %v614, 0
        %v644 = vadd.f32 %v640, %v642
        %v645 = vpack.c.bf16 %v644, %v644
        %v646 = vld [vmem:[%s9] sm:$0xf]
        %v647 = vld [vmem:[%s9 + $0x4] sm:$0xf]
        %v648 = vld [vmem:[%s9 + $0x8] sm:$0xf]
        %v649 = vld [vmem:[%s9 + $0xc] sm:$0xf]
        %v650 = vld [vmem:[%s10] sm:$0x1]
        %v652 = vperm.slane %v650, 0
        %v658 = vunpack.c.l.b16 %v646
        %v659 = vunpack.c.l.b16 %v647
        %v660 = vunpack.c.l.b16 %v648
        %v661 = vunpack.c.l.b16 %v649
        %v662 = vpack.c.b16 %v659, %v658
        %v663 = vpack.c.b16 %v661, %v660
        %v667 = vsel %vm440, %v645, 0
        %669 = vmatpush.bf16.msra.mxu0 0
        %670 = vmatpush.bf16.msra.mxu0 0
        %671 = vmatpush.bf16.msra.mxu0 0
        %672 = vmatpush.bf16.msra.mxu0 0
        %673 = vmatpush.bf16.msra.mxu0 0
        %674 = vmatpush.bf16.msra.mxu0 0
        %675 = vmatpush.bf16.msra.mxu0 %v663
        %676 = vmatpush.bf16.msra.mxu0 %v662
        %677 = vmatmul.bf16.gmra.mxu0 %v667
        %v678 = vpop.f32.mrf.mxu0
        %v679 = vadd.f32 %v652, %v678
        %v680 = vpop.f32.mrf.mxu0
        %681 = vdwg.mxu0
        %v682 = vmul.f32 %v679, 0.5
        %v683 = vmul.f32 %v679, 0.044715
        %v684 = vmul.f32 %v683, %v679
        %v685 = vmul.f32 %v684, %v679
        %v686 = vadd.f32 %v679, %v685
        %v687 = vmul.f32 %v686, 0.7978846
        %v688 = vtanh.pop %v687
        %v689 = vadd.f32 %v688, 1.0
        %v690 = vmul.f32 %v682, %v689
        %v691 = vpack.c.bf16 %v690, %v690
        %v692 = vld [vmem:[%s11] sm:$0xf]
        %v693 = vld [vmem:[%s11 + $0x4] sm:$0xf]
        %v694 = vld [vmem:[%s11 + $0x8] sm:$0xf]
        %v695 = vld [vmem:[%s11 + $0xc] sm:$0xf]
        %v696 = vld [vmem:[%s11 + $0x10] sm:$0xf]
        %v697 = vld [vmem:[%s11 + $0x14] sm:$0xf]
        %v698 = vld [vmem:[%s11 + $0x18] sm:$0xf]
        %v699 = vld [vmem:[%s11 + $0x1c] sm:$0xf]
        %v700 = vld [vmem:[%s11 + $0x20] sm:$0xf]
        %v701 = vld [vmem:[%s11 + $0x24] sm:$0xf]
        %v702 = vld [vmem:[%s11 + $0x28] sm:$0xf]
        %v703 = vld [vmem:[%s11 + $0x2c] sm:$0xf]
        %v704 = vld [vmem:[%s11 + $0x30] sm:$0xf]
        %v705 = vld [vmem:[%s11 + $0x34] sm:$0xf]
        %v706 = vld [vmem:[%s11 + $0x38] sm:$0xf]
        %v707 = vld [vmem:[%s11 + $0x3c] sm:$0xf]
        %v708 = vld [vmem:[%s12] sm:$0x1]
        %v710 = vperm.slane %v708, 0
        %v728 = vunpack.c.l.b16 %v692
        %v729 = vunpack.c.l.b16 %v693
        %v730 = vunpack.c.l.b16 %v694
        %v731 = vunpack.c.l.b16 %v695
        %v732 = vunpack.c.l.b16 %v696
        %v733 = vunpack.c.l.b16 %v697
        %v734 = vunpack.c.l.b16 %v698
        %v735 = vunpack.c.l.b16 %v699
        %v736 = vunpack.c.l.b16 %v700
        %v737 = vunpack.c.l.b16 %v701
        %v738 = vunpack.c.l.b16 %v702
        %v739 = vunpack.c.l.b16 %v703
        %v740 = vunpack.c.l.b16 %v704
        %v741 = vunpack.c.l.b16 %v705
        %v742 = vunpack.c.l.b16 %v706
        %v743 = vunpack.c.l.b16 %v707
        %v744 = vpack.c.b16 %v729, %v728
        %v745 = vpack.c.b16 %v731, %v730
        %v746 = vpack.c.b16 %v733, %v732
        %v747 = vpack.c.b16 %v735, %v734
        %v748 = vpack.c.b16 %v737, %v736
        %v749 = vpack.c.b16 %v739, %v738
        %v750 = vpack.c.b16 %v741, %v740
        %v751 = vpack.c.b16 %v743, %v742
        %760 = vmatpush.bf16.msra.mxu0 %v751
        %761 = vmatpush.bf16.msra.mxu0 %v750
        %762 = vmatpush.bf16.msra.mxu0 %v749
        %763 = vmatpush.bf16.msra.mxu0 %v748
        %764 = vmatpush.bf16.msra.mxu0 %v747
        %765 = vmatpush.bf16.msra.mxu0 %v746
        %766 = vmatpush.bf16.msra.mxu0 %v745
        %767 = vmatpush.bf16.msra.mxu0 %v744
        %768 = vmatmul.bf16.gmra.mxu0 %v691
        %v769 = vpop.f32.mrf.mxu0
        %v770 = vadd.f32 %v710, %v769
        %v771 = vpop.f32.mrf.mxu0
        %772 = vdwg.mxu0
        %v773 = vadd.f32 %v612, %v770
        %774 = vst.msk [vmem:[%s431] sm:$0xff] %vm440, %v773
        %s775 = sand.u32 %s313, 1
        %s776 = scalar_lea.sflag [#allocation3], %s775
        %s777 = sand.u32 %s313, 1
        %s778 = smul.addr %s777, 8
        %s779 = scalar_lea.vmem [#allocation2], %s778
        // Predicated region
        $region73: #{tpu_custom_call.1} parent=71 // pred_check
          %p780 = pneg %p323
        $region74: #{tpu_custom_call.1} parent=71 // pred_check_branch
          %782 = sbr.rel (%p780) target = $region76
        $region75: #{tpu_custom_call.1} parent=71 // pred_region
          %784 = vsyncadd %s776, 0
          %s785 = smul.addr %s27, 8
          %s786 = scalar_lea.hbm %s13, %s785
          %s788 = sshll.u32 %s779, 4
          %s789 = int_to_ptr.vmem [resolvable:$true] %s788
          %s790 = sshll.u32 %s786, 4
          %s791 = int_to_ptr.hbm [resolvable:$true] %s790
          %793 = dma.vmem_to_hbm [thread:$0]  %s789, 128, %s791, %s776
        $region76: #{tpu_custom_call.1} parent=71 // pred_fallthru
          _
      $region72: #{tpu_custom_call.1} parent=5 // pred_fallthru
        _
      %p794 = scmp.le.s32.totalorder 2, %s22
      // Predicated region
      $region77: #{tpu_custom_call.1} parent=5 // pred_check
        %p795 = pneg %p794
      $region78: #{tpu_custom_call.1} parent=5 // pred_check_branch
        %797 = sbr.rel (%p795) target = $region80
      $region79: #{tpu_custom_call.1} parent=5 // pred_region
        %s798 = ssub.s32 %s22, 2
        // Predicated region
        $region81: #{tpu_custom_call.1} parent=79 // pred_check
          %p799 = pneg %p329
        $region82: #{tpu_custom_call.1} parent=79 // pred_check_branch
          %801 = sbr.rel (%p799) target = $region84
        $region83: #{tpu_custom_call.1} parent=79 // pred_region
          %s802 = sand.u32 %s314, 1
          %s803 = scalar_lea.sflag [#allocation3], %s802
          %s804 = sand.u32 %s314, 1
          %s805 = smul.addr %s804, 8
          %s806 = scalar_lea.vmem [#allocation2], %s805
          %808 = dma.done %s803, 128
        $region84: #{tpu_custom_call.1} parent=79 // pred_fallthru
          _
      $region80: #{tpu_custom_call.1} parent=5 // pred_fallthru
        _
    $region6: #{tpu_custom_call.1} parent=1 // loop_footer
      %s26 = sadd.s32 1, %s22
    $region7: #{tpu_custom_call.1} parent=1 // loop_footer_branch
      %21 = sbr.rel target = $region3
    $region8: #{tpu_custom_call.1} parent=1 // loop_exit
      _
    %809 = vsyncpa [#allocation3], 1
    %s810 = scalar_lea.sflag [#allocation3], 1
    %811 = vsyncpa %s810, 1

</llo_original>
